<compile_context>
chip_gen: v6e
topology: v6e:2x2x1
jax: 0.10.0
libtpu: 0.0.40
codegen_flags: <defaults>
</compile_context>

<pallas_src>
import functools

import jax
import jax.numpy as jnp
from jax.experimental import pallas as pl
from jax.experimental.pallas import tpu as pltpu


def _round_up(a, b):
    return ((a + b - 1) // b) * b


def _token_conv_kernel(x_ref, w_ref, b_ref, o_ref, *, tb):
    # x_ref: (tb, L, C)   w_ref: (3, C, Dp)   b_ref: (1, Dp)   o_ref: (tb, L, Dp)
    w_prev = w_ref[0]          # tap for x[t-1]
    w_mid = w_ref[1]           # tap for x[t]
    w_next = w_ref[2]          # tap for x[t+1]
    bias = b_ref[...]          # (1, Dp), broadcasts over rows

    for j in range(tb):        # tb is a small static trace-time constant
        xb = x_ref[j]                              # (L, C)
        x_prev = jnp.roll(xb, 1, axis=0)           # row t -> x[(t-1) % L]
        x_next = jnp.roll(xb, -1, axis=0)          # row t -> x[(t+1) % L]
        acc = jnp.dot(x_prev, w_prev, preferred_element_type=jnp.float32)
        acc += jnp.dot(xb, w_mid, preferred_element_type=jnp.float32)
        acc += jnp.dot(x_next, w_next, preferred_element_type=jnp.float32)
        o_ref[j] = (acc + bias).astype(o_ref.dtype)


def token_embedding_forward(x, weight, bias, *, batch_tile=None):
    """TokenEmbedding forward.

    x:      (B, L, C)   input sequence
    weight: (D, C, 3)   PyTorch Conv1d weight layout (out, in, kernel)
    bias:   (D,)        Conv1d bias
    returns (B, L, D) float32
    """
    x = x.astype(jnp.float32)          # matches `x = x.float()` in the module
    B, L, C = x.shape
    D = weight.shape[0]

    # d_model lane padding only when needed; when D % 128 == 0 the kernel
    # output is returned as-is (no extra slice/copy pass over the output).
    Dp = _round_up(D, 128)
    w_stack = jnp.stack(
        [weight[:, :, k].T for k in range(3)], axis=0
    ).astype(jnp.float32)                                   # (3, C, D)
    b_row = bias.astype(jnp.float32)
    if Dp != D:
        w_stack = jnp.pad(w_stack, ((0, 0), (0, 0), (0, Dp - D)))
        b_row = jnp.pad(b_row, (0, Dp - D))
    b_row = b_row.reshape(1, Dp)

    # Batch tile: amortize the ~0.35us grid-step overhead, keep the
    # double-buffered working set well inside scoped VMEM, ensure tb | B
    # (no padded rows) and >= 2 grid programs so v7x can use both TCs.
    if batch_tile is None:
        tb = max(1, min(8, 1024 // max(L, 1)))
    else:
        tb = int(batch_tile)
    tb = max(1, min(tb, B))

    def _vmem_bytes(t):  # 2x double-buffered in/out blocks + resident weights/bias
        return 4 * (2 * t * L * (C + Dp) + 3 * C * Dp + Dp)

    while tb > 1 and _vmem_bytes(tb) > 24 * 1024 * 1024:
        tb -= 1
    if B >= 2:
        tb = min(tb, B // 2)           # at least 2 programs for megacore
    while B % tb != 0:
        tb -= 1                        # exact tiling: no padded batch rows
    grid = (B // tb,)

    out = pl.pallas_call(
        functools.partial(_token_conv_kernel, tb=tb),
        out_shape=jax.ShapeDtypeStruct((B, L, Dp), jnp.float32),
        grid_spec=pltpu.PrefetchScalarGridSpec(
            num_scalar_prefetch=0,
            grid=grid,
            in_specs=[
                pl.BlockSpec((tb, L, C), lambda i: (i, 0, 0)),   # x streamed once
                pl.BlockSpec((3, C, Dp), lambda i: (0, 0, 0)),   # conv taps, resident
                pl.BlockSpec((1, Dp), lambda i: (0, 0)),         # bias row, resident
            ],
            out_specs=pl.BlockSpec((tb, L, Dp), lambda i: (i, 0, 0)),
        ),
        compiler_params=pltpu.CompilerParams(
            dimension_semantics=("parallel",),      # batch axis shards across TCs
            vmem_limit_bytes=32 * 1024 * 1024,      # safe headroom on v5e/v6e/v7x
        ),
    )(x, w_stack, b_row)

    if Dp != D:
        out = out[..., :D]             # fallback only when D isn't a lane multiple
    return out


if __name__ == "__main__":
    key = jax.random.PRNGKey(0)
    kx, kw, kb = jax.random.split(key, 3)

    # Small shapes consistent with TokenEmbedding: x (batch, seq, c_in)
    B, L, C, D = 2, 16, 4, 32
    x = jax.random.normal(kx, (B, L, C), dtype=jnp.float32)
    # Deterministic kaiming-ish Conv1d weight (D, C, 3) and bias (D,)
    w = jax.random.normal(kw, (D, C, 3), dtype=jnp.float32) * (2.0 / (C * 3)) ** 0.5
    b = jax.random.normal(kb, (D,), dtype=jnp.float32) * 0.01

    out = token_embedding_forward(x, w, b)
    out = jax.block_until_ready(out)

    # Independent reference: circular pad + lax conv (cross-correlation, like PyTorch)
    x_ncl = jnp.transpose(x, (0, 2, 1))                            # (B, C, L)
    x_pad = jnp.pad(x_ncl, ((0, 0), (0, 0), (1, 1)), mode="wrap")  # circular padding
    ref = jax.lax.conv_general_dilated(
        x_pad, w, window_strides=(1,), padding="VALID",
        dimension_numbers=("NCH", "OIH", "NCH"),
    )
    ref = jnp.transpose(ref, (0, 2, 1)) + b                        # (B, L, D)

    assert out.shape == (B, L, D)
    assert jnp.allclose(out, ref, atol=1e-4, rtol=1e-4)

    print("KERNEL_OK")
</pallas_src>

<mosaic_0001>
module attributes {stable_mosaic.version = 11 : i64} {
  func.func @_token_conv_kernel(%arg0: i32, %arg1: memref<1x16x4xf32, #tpu.memory_space<vmem>>, %arg2: memref<3x4x128xf32, #tpu.memory_space<vmem>>, %arg3: memref<1x128xf32, #tpu.memory_space<vmem>>, %arg4: memref<1x16x128xf32, #tpu.memory_space<vmem>>) attributes {dimension_semantics = [#tpu.dimension_semantics<parallel>], iteration_bounds = array<i64: 2>, scalar_prefetch = 0 : i64, scratch_operands = 0 : i64, tpu.core_type = #tpu.core_type<tc>, window_params = [{transform_indices = @transform_0, window_bounds = array<i64: 1, 16, 4>}, {pipeline_mode = #tpu.pipeline_mode<synchronous>, transform_indices = @transform_1, window_bounds = array<i64: 3, 4, 128>}, {pipeline_mode = #tpu.pipeline_mode<synchronous>, transform_indices = @transform_2, window_bounds = array<i64: 1, 128>}, {transform_indices = @transform_3, window_bounds = array<i64: 1, 16, 128>}]} {
    %c0 = arith.constant 0 : index
    %c0_0 = arith.constant 0 : index
    %c0_1 = arith.constant 0 : index
    %0 = vector.load %arg2[%c0, %c0_0, %c0_1] : memref<3x4x128xf32, #tpu.memory_space<vmem>>, vector<1x4x128xf32>
    %1 = vector.shape_cast %0 : vector<1x4x128xf32> to vector<4x128xf32>
    %c1 = arith.constant 1 : index
    %c0_2 = arith.constant 0 : index
    %c0_3 = arith.constant 0 : index
    %2 = vector.load %arg2[%c1, %c0_2, %c0_3] : memref<3x4x128xf32, #tpu.memory_space<vmem>>, vector<1x4x128xf32>
    %3 = vector.shape_cast %2 : vector<1x4x128xf32> to vector<4x128xf32>
    %c2 = arith.constant 2 : index
    %c0_4 = arith.constant 0 : index
    %c0_5 = arith.constant 0 : index
    %4 = vector.load %arg2[%c2, %c0_4, %c0_5] : memref<3x4x128xf32, #tpu.memory_space<vmem>>, vector<1x4x128xf32>
    %5 = vector.shape_cast %4 : vector<1x4x128xf32> to vector<4x128xf32>
    %c0_6 = arith.constant 0 : index
    %c0_7 = arith.constant 0 : index
    %6 = vector.load %arg3[%c0_6, %c0_7] : memref<1x128xf32, #tpu.memory_space<vmem>>, vector<1x128xf32>
    %c0_8 = arith.constant 0 : index
    %c0_9 = arith.constant 0 : index
    %c0_10 = arith.constant 0 : index
    %7 = vector.load %arg1[%c0_8, %c0_9, %c0_10] : memref<1x16x4xf32, #tpu.memory_space<vmem>>, vector<1x16x4xf32>
    %8 = vector.shape_cast %7 : vector<1x16x4xf32> to vector<16x4xf32>
    %9 = vector.extract_strided_slice %8 {offsets = [15, 0], sizes = [1, 4], strides = [1, 1]} : vector<16x4xf32> to vector<1x4xf32>
    %10 = vector.extract_strided_slice %8 {offsets = [0, 0], sizes = [15, 4], strides = [1, 1]} : vector<16x4xf32> to vector<15x4xf32>
    %11 = tpu.concatenate %9, %10 in 0 : vector<1x4xf32>, vector<15x4xf32> -> vector<16x4xf32>
    %12 = vector.extract_strided_slice %8 {offsets = [1, 0], sizes = [15, 4], strides = [1, 1]} : vector<16x4xf32> to vector<15x4xf32>
    %13 = vector.extract_strided_slice %8 {offsets = [0, 0], sizes = [1, 4], strides = [1, 1]} : vector<16x4xf32> to vector<1x4xf32>
    %14 = tpu.concatenate %12, %13 in 0 : vector<15x4xf32>, vector<1x4xf32> -> vector<16x4xf32>
    %cst = arith.constant dense<0.000000e+00> : vector<16x128xf32>
    %15 = tpu.matmul %11, %1, %cst {dimension_numbers = #tpu.dot_dimension_numbers<[1], [0], [0], [1], [0, 0, 1, 1], [], []>} : vector<16x4xf32>, vector<4x128xf32>, vector<16x128xf32> -> vector<16x128xf32>
    %cst_11 = arith.constant dense<0.000000e+00> : vector<16x128xf32>
    %16 = tpu.matmul %8, %3, %cst_11 {dimension_numbers = #tpu.dot_dimension_numbers<[1], [0], [0], [1], [0, 0, 1, 1], [], []>} : vector<16x4xf32>, vector<4x128xf32>, vector<16x128xf32> -> vector<16x128xf32>
    %17 = arith.addf %15, %16 : vector<16x128xf32>
    %cst_12 = arith.constant dense<0.000000e+00> : vector<16x128xf32>
    %18 = tpu.matmul %14, %5, %cst_12 {dimension_numbers = #tpu.dot_dimension_numbers<[1], [0], [0], [1], [0, 0, 1, 1], [], []>} : vector<16x4xf32>, vector<4x128xf32>, vector<16x128xf32> -> vector<16x128xf32>
    %19 = arith.addf %17, %18 : vector<16x128xf32>
    %20 = vector.broadcast %6 : vector<1x128xf32> to vector<16x128xf32>
    %21 = arith.addf %19, %20 : vector<16x128xf32>
    %c0_13 = arith.constant 0 : index
    %c0_14 = arith.constant 0 : index
    %c0_15 = arith.constant 0 : index
    %22 = vector.load %arg4[%c0_13, %c0_14, %c0_15] : memref<1x16x128xf32, #tpu.memory_space<vmem>>, vector<1x16x128xf32>
    %23 = vector.shape_cast %22 : vector<1x16x128xf32> to vector<16x128xf32>
    %24 = vector.shape_cast %21 : vector<16x128xf32> to vector<1x16x128xf32>
    tpu.vector_store %arg4[%c0_13, %c0_14, %c0_15], %24 {strides = array<i32>} : memref<1x16x128xf32, #tpu.memory_space<vmem>>, vector<1x16x128xf32>,
    return
  }
  func.func @transform_0(%arg0: i32) -> (i32, i32, i32) {
    %c0_i32 = arith.constant 0 : i32
    %c0_i32_0 = arith.constant 0 : i32
    %c0_i32_1 = arith.constant 0 : i32
    return %arg0, %c0_i32, %c0_i32_0 : i32, i32, i32
  }
  func.func @transform_1(%arg0: i32) -> (i32, i32, i32) {
    %c0_i32 = arith.constant 0 : i32
    %c0_i32_0 = arith.constant 0 : i32
    %c0_i32_1 = arith.constant 0 : i32
    %c0_i32_2 = arith.constant 0 : i32
    return %c0_i32, %c0_i32_0, %c0_i32_1 : i32, i32, i32
  }
  func.func @transform_2(%arg0: i32) -> (i32, i32) {
    %c0_i32 = arith.constant 0 : i32
    %c0_i32_0 = arith.constant 0 : i32
    %c0_i32_1 = arith.constant 0 : i32
    return %c0_i32, %c0_i32_0 : i32, i32
  }
  func.func @transform_3(%arg0: i32) -> (i32, i32, i32) {
    %c0_i32 = arith.constant 0 : i32
    %c0_i32_0 = arith.constant 0 : i32
    %c0_i32_1 = arith.constant 0 : i32
    return %arg0, %c0_i32, %c0_i32_0 : i32, i32, i32
  }
}

</mosaic_0001>

<llo_original>
// kernel: tpu_custom_call.1
$region0: #{tpu_custom_call.1}
  #allocation0 [shape = 'u32[]', space=smem, size = 0x4, offset = 0x4, fixed_abs, tag = 'smem constant byte address 0x4 - core index']
  #allocation1 [shape = 'u32[144,128]{1,0:T(1,128)}', space=vmem, size = 0x12000, scoped, tag = 'internal scratch']
  %s0 = inlined_call_operand.vmem [shape: f32[2,16,4], index: 0, kind: input, shape index: {}]
  %s1 = inlined_call_operand.vmem [shape: f32[3,4,128], index: 1, kind: input, shape index: {}]
  %s2 = inlined_call_operand.vmem [shape: f32[1,128], index: 2, kind: input, shape index: {}]
  %s3 = inlined_call_operand.hbm [shape: f32[2,16,128], index: 3, kind: output, shape index: {}]
  %s4 = sld [smem:[#allocation0]]
  $region45: #{tpu_custom_call.1} parent=0
    _
  %s6 = ssub.s32 1, %s4
  %s7 = scalar_select 0, %s6, %s4
  $region1: #{tpu_custom_call.1} parent=0
    #allocation2 [shape = 'u8[16384]{0}', space=vmem, size = 0x4000, scoped, tag = 'output window, operand 0']
    #allocation3 [shape = 's32[2]{0}', space=sflag, size = 0x8, scoped, tag = 'scoped memory for tpu_custom_call.1']
    %8 = vsyncpa [#allocation3], 0
    %s9 = scalar_lea.sflag [#allocation3], 1
    %10 = vsyncpa %s9, 0
    loop: start=0, step=1, limit=4
    $region2: #{tpu_custom_call.1} parent=1 // loop_pre_header
      _
    $region3: #{tpu_custom_call.1} parent=1 // loop_header
      %s12 = sphi 0, %s16
      %p13 = scmp.ge.s32.totalorder %s12, 4
      %s22 = sphi 0, %s24
      %s25 = sphi 0, %s22
      %s26 = sphi 0, %s25
      %s42 = sphi 0, %s26
      %s46 = sphi 0, %s46
      %s48 = sphi 0, %s46
      %s49 = sphi 0, %s48
      %s63 = sphi 0, %s49
      %s67 = sphi 0, %s67
      %s69 = sphi 0, %s67
      %s70 = sphi 0, %s69
      %s84 = sphi 0, %s70
      %s90 = sphi 0, %s92
      %s93 = sphi 0, %s90
      %s94 = sphi 0, %s93
      %s110 = sphi 0, %s94
    $region4: #{tpu_custom_call.1} parent=1 // loop_header_branch
      %15 = sbr.rel (%p13) target = $region8
    $region5: #{tpu_custom_call.1} parent=1 // loop_body
      %s17 = ssub.s32 %s12, 1
      %s18 = ssub.s32 %s12, 2
      %s19 = sadd.s32 %s12, 1
      %s20 = ssub.s32 %s12, %s19
      %p21 = scmp.eq.s32.totalorder %s20, 0
      %s23 = sadd.s32 %s22, 1
      %s24 = scalar_select %p21, %s22, %s23
      %p27 = pneg %p21
      %p28 = scmp.eq.s32.totalorder %s12, 1
      %p29 = por %p27, %p28
      %p30 = scmp.ne.s32.totalorder %s22, %s25
      %p31 = scmp.eq.s32.totalorder %s12, 0
      %p32 = por %p30, %p31
      %p33 = scmp.ne.s32.totalorder %s22, %s25
      %p34 = scmp.eq.s32.totalorder %s17, 1
      %p35 = por %p33, %p34
      %p36 = scmp.ne.s32.totalorder %s25, %s26
      %p37 = scmp.eq.s32.totalorder %s17, 0
      %p38 = por %p36, %p37
      %p39 = scmp.ne.s32.totalorder %s25, %s26
      %p40 = scmp.eq.s32.totalorder %s18, 1
      %p41 = por %p39, %p40
      %p43 = scmp.ne.s32.totalorder %s26, %s42
      %p44 = scmp.eq.s32.totalorder %s18, 0
      %p45 = por %p43, %p44
      %s47 = sadd.s32 %s46, 1
      %p50 = scmp.eq.s32.totalorder %s12, 1
      %p51 = scmp.ne.s32.totalorder %s46, %s48
      %p52 = scmp.eq.s32.totalorder %s12, 0
      %p53 = por %p51, %p52
      %p54 = scmp.ne.s32.totalorder %s46, %s48
      %p55 = scmp.eq.s32.totalorder %s17, 1
      %p56 = por %p54, %p55
      %p57 = scmp.ne.s32.totalorder %s48, %s49
      %p58 = scmp.eq.s32.totalorder %s17, 0
      %p59 = por %p57, %p58
      %p60 = scmp.ne.s32.totalorder %s48, %s49
      %p61 = scmp.eq.s32.totalorder %s18, 1
      %p62 = por %p60, %p61
      %p64 = scmp.ne.s32.totalorder %s49, %s63
      %p65 = scmp.eq.s32.totalorder %s18, 0
      %p66 = por %p64, %p65
      %s68 = sadd.s32 %s67, 1
      %p71 = scmp.eq.s32.totalorder %s12, 1
      %p72 = scmp.ne.s32.totalorder %s67, %s69
      %p73 = scmp.eq.s32.totalorder %s12, 0
      %p74 = por %p72, %p73
      %p75 = scmp.ne.s32.totalorder %s67, %s69
      %p76 = scmp.eq.s32.totalorder %s17, 1
      %p77 = por %p75, %p76
      %p78 = scmp.ne.s32.totalorder %s69, %s70
      %p79 = scmp.eq.s32.totalorder %s17, 0
      %p80 = por %p78, %p79
      %p81 = scmp.ne.s32.totalorder %s69, %s70
      %p82 = scmp.eq.s32.totalorder %s18, 1
      %p83 = por %p81, %p82
      %p85 = scmp.ne.s32.totalorder %s70, %s84
      %p86 = scmp.eq.s32.totalorder %s18, 0
      %p87 = por %p85, %p86
      %s88 = ssub.s32 %s12, %s19
      %p89 = scmp.eq.s32.totalorder %s88, 0
      %s91 = sadd.s32 %s90, 1
      %s92 = scalar_select %p89, %s90, %s91
      %p95 = pneg %p89
      %p96 = scmp.eq.s32.totalorder %s12, 1
      %p97 = por %p95, %p96
      %p98 = scmp.ne.s32.totalorder %s90, %s93
      %p99 = scmp.eq.s32.totalorder %s12, 0
      %p100 = por %p98, %p99
      %p101 = scmp.ne.s32.totalorder %s90, %s93
      %p102 = scmp.eq.s32.totalorder %s17, 1
      %p103 = por %p101, %p102
      %p104 = scmp.ne.s32.totalorder %s93, %s94
      %p105 = scmp.eq.s32.totalorder %s17, 0
      %p106 = por %p104, %p105
      %p107 = scmp.ne.s32.totalorder %s93, %s94
      %p108 = scmp.eq.s32.totalorder %s18, 1
      %p109 = por %p107, %p108
      %p111 = scmp.ne.s32.totalorder %s94, %s110
      %p112 = scmp.eq.s32.totalorder %s18, 0
      %p113 = por %p111, %p112
      %p114 = scmp.le.s32.totalorder 1, %s12
      %p115 = scmp.lt.s32.totalorder %s12, 3
      %p116 = pnand %p114, %p115
      %p117 = pneg %p116
      // Predicated region
      $region9: #{tpu_custom_call.1} parent=5 // pred_check
        _
      $region10: #{tpu_custom_call.1} parent=5 // pred_check_branch
        %119 = sbr.rel (%p116) target = $region12
      $region11: #{tpu_custom_call.1} parent=5 // pred_region
        %s120 = ssub.s32 %s12, 1
        // Predicated region
        $region13: #{tpu_custom_call.1} parent=11 // pred_check
          %p121 = pneg %p59
        $region14: #{tpu_custom_call.1} parent=11 // pred_check_branch
          %123 = sbr.rel (%p121) target = $region16
        $region15: #{tpu_custom_call.1} parent=11 // pred_region
          _
        $region16: #{tpu_custom_call.1} parent=11 // pred_fallthru
          _
        // Predicated region
        $region17: #{tpu_custom_call.1} parent=11 // pred_check
          %p124 = pneg %p80
        $region18: #{tpu_custom_call.1} parent=11 // pred_check_branch
          %126 = sbr.rel (%p124) target = $region20
        $region19: #{tpu_custom_call.1} parent=11 // pred_region
          _
        $region20: #{tpu_custom_call.1} parent=11 // pred_fallthru
          _
      $region12: #{tpu_custom_call.1} parent=5 // pred_fallthru
        _
      %p127 = scmp.lt.s32.totalorder %s12, 2
      // Predicated region
      $region21: #{tpu_custom_call.1} parent=5 // pred_check
        %p128 = pneg %p127
      $region22: #{tpu_custom_call.1} parent=5 // pred_check_branch
        %130 = sbr.rel (%p128) target = $region24
      $region23: #{tpu_custom_call.1} parent=5 // pred_region
        // Predicated region
        $region25: #{tpu_custom_call.1} parent=23 // pred_check
          %p131 = pneg %p32
        $region26: #{tpu_custom_call.1} parent=23 // pred_check_branch
          %133 = sbr.rel (%p131) target = $region28
        $region27: #{tpu_custom_call.1} parent=23 // pred_region
          %p134 = scmp.lt.s32.totalorder %s12, 1
          %s135 = scalar_select %p134, %s12, 1
          %s136 = smul.addr %s135, 2
          %s137 = smul.addr %s136, 8
          %s138 = scalar_lea.vmem %s0, %s137
        $region28: #{tpu_custom_call.1} parent=23 // pred_fallthru
          _
      $region24: #{tpu_custom_call.1} parent=5 // pred_fallthru
        _
      %p139 = scmp.le.s32.totalorder 1, %s12
      %p140 = scmp.lt.s32.totalorder %s12, 3
      %p141 = pnand %p139, %p140
      %p142 = pneg %p141
      // Predicated region
      $region29: #{tpu_custom_call.1} parent=5 // pred_check
        _
      $region30: #{tpu_custom_call.1} parent=5 // pred_check_branch
        %144 = sbr.rel (%p141) target = $region32
      $region31: #{tpu_custom_call.1} parent=5 // pred_region
        %s145 = ssub.s32 %s12, 1
        %p146 = scmp.lt.s32.totalorder %s17, 1
        %s147 = scalar_select %p146, %s17, 1
        %s148 = smul.addr %s147, 2
        %s149 = smul.addr %s148, 8
        %s150 = scalar_lea.vmem %s0, %s149
        %p151 = pneg %p38
        %p152 = pneg %p35
        %p153 = pneg %p59
        %p154 = pneg %p56
        %p155 = pneg %p80
        %p156 = pneg %p77
        %p157 = pneg %p106
        %p158 = pneg %p103
        %s159 = sand.u32 %s93, 1
        %s160 = scalar_lea.sflag [#allocation3], %s159
        %s161 = sand.u32 %s93, 1
        %s162 = smul.addr %s161, 16
        %s163 = scalar_lea.vmem [#allocation2], %s162
        %p164 = scmp.lt.s32.totalorder %s17, 1
        %s165 = scalar_select %p164, %s17, 1
        %s166 = smul.addr %s165, 2
        %s167 = smul.addr %s166, 8
        %s168 = scalar_lea.vmem %s0, %s167
        %v169 = vld [vmem:[%s1] sm:$0xf]
        %s170 = scalar_lea.vmem %s1, 4
        %v171 = vld [vmem:[%s170] sm:$0xf]
        %s172 = scalar_lea.vmem %s1, 8
        %v173 = vld [vmem:[%s172] sm:$0xf]
        %v174 = vld [vmem:[%s2] sm:$0x1]
        %v175 = vld [vmem:[%s168] sm:$0xff]
        %v176 = vld [vmem:[%s168 + $0x8] sm:$0xff]
        %v178 = vrot.slane %v176, 7
        %vm181 = vcmask 1040384
        %v182 = vrot.slane %v175, 7
        %v183 = vsel %vm181, %v182, %v178
        %v185 = vsel %vm181, %v178, %v182
        %vm186 = vcmask 1046528
        %v187 = vrot.slane %v175, 1
        %v188 = vrot.slane %v176, 1
        %v189 = vsel %vm186, %v187, %v188
        %v192 = vsel %vm186, %v188, %v187
        %vm193 = vcmask 31744
        %v194 = vsel %vm193, %v175, 0
        %v196 = vsel %vm193, %v176, 0
        %vm198 = vcmask 1043456
        %v200 = vsel %vm198, %v171, 0
        %202 = vmatprep.subr.mxu0 0.0
        %203 = vmatpush1.msra.mxu0 0.0
        %204 = vmatprep.subr.mxu0 0.0
        %205 = vmatpush1.msra.mxu0 0.0
        %206 = vmatprep.subr.mxu0 0.0
        %207 = vmatpush1.msra.mxu0 0.0
        %208 = vmatprep.subr.mxu0 0.0
        %209 = vmatpush1.msra.mxu0 0.0
        %210 = vmatprep.subr.mxu0 0.0
        %211 = vmatpush1.msra.mxu0 0.0
        %212 = vmatprep.subr.mxu0 0.0
        %213 = vmatpush1.msra.mxu0 0.0
        %214 = vmatprep.subr.mxu0 0.0
        %215 = vmatpush1.msra.mxu0 0.0
        %216 = vmatprep.subr.mxu0 0.0
        %217 = vmatpush1.msra.mxu0 0.0
        %218 = vmatprep.subr.mxu0 0.0
        %219 = vmatpush1.msra.mxu0 0.0
        %220 = vmatprep.subr.mxu0 0.0
        %221 = vmatpush1.msra.mxu0 0.0
        %222 = vmatprep.subr.mxu0 0.0
        %223 = vmatpush1.msra.mxu0 0.0
        %224 = vmatprep.subr.mxu0 0.0
        %225 = vmatpush1.msra.mxu0 0.0
        %226 = vmatprep.subr.mxu0 0.0
        %227 = vmatpush1.msra.mxu0 0.0
        %228 = vmatprep.subr.mxu0 0.0
        %229 = vmatpush1.msra.mxu0 0.0
        %230 = vmatprep.subr.mxu0 0.0
        %231 = vmatpush1.msra.mxu0 0.0
        %232 = vmatprep.subr.mxu0 0.0
        %233 = vmatpush1.msra.mxu0 %v200
        %234 = vmatprep.subr.mxu0 0.0
        %235 = vmatpush2.msra.mxu0 0.0
        %236 = vmatprep.subr.mxu0 0.0
        %237 = vmatpush2.msra.mxu0 0.0
        %238 = vmatprep.subr.mxu0 0.0
        %239 = vmatpush2.msra.mxu0 0.0
        %240 = vmatprep.subr.mxu0 0.0
        %241 = vmatpush2.msra.mxu0 0.0
        %242 = vmatprep.subr.mxu0 0.0
        %243 = vmatpush2.msra.mxu0 0.0
        %244 = vmatprep.subr.mxu0 0.0
        %245 = vmatpush2.msra.mxu0 0.0
        %246 = vmatprep.subr.mxu0 0.0
        %247 = vmatpush2.msra.mxu0 0.0
        %248 = vmatprep.subr.mxu0 0.0
        %249 = vmatpush2.msra.mxu0 0.0
        %250 = vmatprep.subr.mxu0 0.0
        %251 = vmatpush2.msra.mxu0 0.0
        %252 = vmatprep.subr.mxu0 0.0
        %253 = vmatpush2.msra.mxu0 0.0
        %254 = vmatprep.subr.mxu0 0.0
        %255 = vmatpush2.msra.mxu0 0.0
        %256 = vmatprep.subr.mxu0 0.0
        %257 = vmatpush2.msra.mxu0 0.0
        %258 = vmatprep.subr.mxu0 0.0
        %259 = vmatpush2.msra.mxu0 0.0
        %260 = vmatprep.subr.mxu0 0.0
        %261 = vmatpush2.msra.mxu0 0.0
        %262 = vmatprep.subr.mxu0 0.0
        %263 = vmatpush2.msra.mxu0 0.0
        %264 = vmatprep.subr.mxu0 0.0
        %265 = vmatpush2.msra.mxu0 0.0
        %266 = vmatprep.mubr.f32.mxu0 0.0
        %267 = vmatmul.mubr.f32.gmra.mxu0 %v194
        %v268 = vpop.f32.mrf.mxu0
        %v269 = vadd.f32 0.0, %v268
        %v270 = vpop.f32.mrf.mxu0
        %271 = vmatprep.mubr.f32.mxu0 0.0
        %272 = vmatmul.mubr.f32.gmra.mxu0 %v196
        %v273 = vpop.f32.mrf.mxu0
        %v274 = vadd.f32 0.0, %v273
        %v275 = vpop.f32.mrf.mxu0
        %276 = vdwg.mxu0
        %v278 = vsel %vm193, %v185, 0
        %v280 = vsel %vm193, %v183, 0
        %v283 = vsel %vm198, %v169, 0
        %285 = vmatprep.subr.mxu0 0.0
        %286 = vmatpush1.msra.mxu0 0.0
        %287 = vmatprep.subr.mxu0 0.0
        %288 = vmatpush1.msra.mxu0 0.0
        %289 = vmatprep.subr.mxu0 0.0
        %290 = vmatpush1.msra.mxu0 0.0
        %291 = vmatprep.subr.mxu0 0.0
        %292 = vmatpush1.msra.mxu0 0.0
        %293 = vmatprep.subr.mxu0 0.0
        %294 = vmatpush1.msra.mxu0 0.0
        %295 = vmatprep.subr.mxu0 0.0
        %296 = vmatpush1.msra.mxu0 0.0
        %297 = vmatprep.subr.mxu0 0.0
        %298 = vmatpush1.msra.mxu0 0.0
        %299 = vmatprep.subr.mxu0 0.0
        %300 = vmatpush1.msra.mxu0 0.0
        %301 = vmatprep.subr.mxu0 0.0
        %302 = vmatpush1.msra.mxu0 0.0
        %303 = vmatprep.subr.mxu0 0.0
        %304 = vmatpush1.msra.mxu0 0.0
        %305 = vmatprep.subr.mxu0 0.0
        %306 = vmatpush1.msra.mxu0 0.0
        %307 = vmatprep.subr.mxu0 0.0
        %308 = vmatpush1.msra.mxu0 0.0
        %309 = vmatprep.subr.mxu0 0.0
        %310 = vmatpush1.msra.mxu0 0.0
        %311 = vmatprep.subr.mxu0 0.0
        %312 = vmatpush1.msra.mxu0 0.0
        %313 = vmatprep.subr.mxu0 0.0
        %314 = vmatpush1.msra.mxu0 0.0
        %315 = vmatprep.subr.mxu0 0.0
        %316 = vmatpush1.msra.mxu0 %v283
        %317 = vmatprep.subr.mxu0 0.0
        %318 = vmatpush2.msra.mxu0 0.0
        %319 = vmatprep.subr.mxu0 0.0
        %320 = vmatpush2.msra.mxu0 0.0
        %321 = vmatprep.subr.mxu0 0.0
        %322 = vmatpush2.msra.mxu0 0.0
        %323 = vmatprep.subr.mxu0 0.0
        %324 = vmatpush2.msra.mxu0 0.0
        %325 = vmatprep.subr.mxu0 0.0
        %326 = vmatpush2.msra.mxu0 0.0
        %327 = vmatprep.subr.mxu0 0.0
        %328 = vmatpush2.msra.mxu0 0.0
        %329 = vmatprep.subr.mxu0 0.0
        %330 = vmatpush2.msra.mxu0 0.0
        %331 = vmatprep.subr.mxu0 0.0
        %332 = vmatpush2.msra.mxu0 0.0
        %333 = vmatprep.subr.mxu0 0.0
        %334 = vmatpush2.msra.mxu0 0.0
        %335 = vmatprep.subr.mxu0 0.0
        %336 = vmatpush2.msra.mxu0 0.0
        %337 = vmatprep.subr.mxu0 0.0
        %338 = vmatpush2.msra.mxu0 0.0
        %339 = vmatprep.subr.mxu0 0.0
        %340 = vmatpush2.msra.mxu0 0.0
        %341 = vmatprep.subr.mxu0 0.0
        %342 = vmatpush2.msra.mxu0 0.0
        %343 = vmatprep.subr.mxu0 0.0
        %344 = vmatpush2.msra.mxu0 0.0
        %345 = vmatprep.subr.mxu0 0.0
        %346 = vmatpush2.msra.mxu0 0.0
        %347 = vmatprep.subr.mxu0 0.0
        %348 = vmatpush2.msra.mxu0 0.0
        %349 = vmatprep.mubr.f32.mxu0 0.0
        %350 = vmatmul.mubr.f32.gmra.mxu0 %v278
        %v351 = vpop.f32.mrf.mxu0
        %v352 = vadd.f32 %v269, %v351
        %v353 = vpop.f32.mrf.mxu0
        %354 = vmatprep.mubr.f32.mxu0 0.0
        %355 = vmatmul.mubr.f32.gmra.mxu0 %v280
        %v356 = vpop.f32.mrf.mxu0
        %v357 = vadd.f32 %v274, %v356
        %v358 = vpop.f32.mrf.mxu0
        %359 = vdwg.mxu0
        %v360 = vsel %vm193, %v189, 0
        %v363 = vsel %vm193, %v192, 0
        %v366 = vsel %vm198, %v173, 0
        %368 = vmatprep.subr.mxu0 0.0
        %369 = vmatpush1.msra.mxu0 0.0
        %370 = vmatprep.subr.mxu0 0.0
        %371 = vmatpush1.msra.mxu0 0.0
        %372 = vmatprep.subr.mxu0 0.0
        %373 = vmatpush1.msra.mxu0 0.0
        %374 = vmatprep.subr.mxu0 0.0
        %375 = vmatpush1.msra.mxu0 0.0
        %376 = vmatprep.subr.mxu0 0.0
        %377 = vmatpush1.msra.mxu0 0.0
        %378 = vmatprep.subr.mxu0 0.0
        %379 = vmatpush1.msra.mxu0 0.0
        %380 = vmatprep.subr.mxu0 0.0
        %381 = vmatpush1.msra.mxu0 0.0
        %382 = vmatprep.subr.mxu0 0.0
        %383 = vmatpush1.msra.mxu0 0.0
        %384 = vmatprep.subr.mxu0 0.0
        %385 = vmatpush1.msra.mxu0 0.0
        %386 = vmatprep.subr.mxu0 0.0
        %387 = vmatpush1.msra.mxu0 0.0
        %388 = vmatprep.subr.mxu0 0.0
        %389 = vmatpush1.msra.mxu0 0.0
        %390 = vmatprep.subr.mxu0 0.0
        %391 = vmatpush1.msra.mxu0 0.0
        %392 = vmatprep.subr.mxu0 0.0
        %393 = vmatpush1.msra.mxu0 0.0
        %394 = vmatprep.subr.mxu0 0.0
        %395 = vmatpush1.msra.mxu0 0.0
        %396 = vmatprep.subr.mxu0 0.0
        %397 = vmatpush1.msra.mxu0 0.0
        %398 = vmatprep.subr.mxu0 0.0
        %399 = vmatpush1.msra.mxu0 %v366
        %400 = vmatprep.subr.mxu0 0.0
        %401 = vmatpush2.msra.mxu0 0.0
        %402 = vmatprep.subr.mxu0 0.0
        %403 = vmatpush2.msra.mxu0 0.0
        %404 = vmatprep.subr.mxu0 0.0
        %405 = vmatpush2.msra.mxu0 0.0
        %406 = vmatprep.subr.mxu0 0.0
        %407 = vmatpush2.msra.mxu0 0.0
        %408 = vmatprep.subr.mxu0 0.0
        %409 = vmatpush2.msra.mxu0 0.0
        %410 = vmatprep.subr.mxu0 0.0
        %411 = vmatpush2.msra.mxu0 0.0
        %412 = vmatprep.subr.mxu0 0.0
        %413 = vmatpush2.msra.mxu0 0.0
        %414 = vmatprep.subr.mxu0 0.0
        %415 = vmatpush2.msra.mxu0 0.0
        %416 = vmatprep.subr.mxu0 0.0
        %417 = vmatpush2.msra.mxu0 0.0
        %418 = vmatprep.subr.mxu0 0.0
        %419 = vmatpush2.msra.mxu0 0.0
        %420 = vmatprep.subr.mxu0 0.0
        %421 = vmatpush2.msra.mxu0 0.0
        %422 = vmatprep.subr.mxu0 0.0
        %423 = vmatpush2.msra.mxu0 0.0
        %424 = vmatprep.subr.mxu0 0.0
        %425 = vmatpush2.msra.mxu0 0.0
        %426 = vmatprep.subr.mxu0 0.0
        %427 = vmatpush2.msra.mxu0 0.0
        %428 = vmatprep.subr.mxu0 0.0
        %429 = vmatpush2.msra.mxu0 0.0
        %430 = vmatprep.subr.mxu0 0.0
        %431 = vmatpush2.msra.mxu0 0.0
        %432 = vmatprep.mubr.f32.mxu0 0.0
        %433 = vmatmul.mubr.f32.gmra.mxu0 %v360
        %v434 = vpop.f32.mrf.mxu0
        %v435 = vadd.f32 0.0, %v434
        %v436 = vpop.f32.mrf.mxu0
        %437 = vmatprep.mubr.f32.mxu0 0.0
        %438 = vmatmul.mubr.f32.gmra.mxu0 %v363
        %v439 = vpop.f32.mrf.mxu0
        %v440 = vadd.f32 0.0, %v439
        %v441 = vpop.f32.mrf.mxu0
        %442 = vdwg.mxu0
        %v443 = vadd.f32 %v352, %v435
        %v444 = vadd.f32 %v357, %v440
        %v446 = vlaneseq
        %v447 = vshrl.u32 %v446, 7
        %v448 = vsub.s32 0, %v447
        %v449 = vrot.slane %v174, %v448
        %v451 = vadd.f32 %v443, %v449
        %v452 = vadd.f32 %v444, %v449
        %453 = vst [vmem:[%s163] sm:$0xff] %v451
        %454 = vst [vmem:[%s163 + $0x8] sm:$0xff] %v452
        %s455 = sand.u32 %s93, 1
        %s456 = scalar_lea.sflag [#allocation3], %s455
        %s457 = sand.u32 %s93, 1
        %s458 = smul.addr %s457, 16
        %s459 = scalar_lea.vmem [#allocation2], %s458
        // Predicated region
        $region33: #{tpu_custom_call.1} parent=31 // pred_check
          %p460 = pneg %p103
        $region34: #{tpu_custom_call.1} parent=31 // pred_check_branch
          %462 = sbr.rel (%p460) target = $region36
        $region35: #{tpu_custom_call.1} parent=31 // pred_region
          %s464 = ssub.s32 256, 256
          %465 = vsyncadd %s456, %s464
          %s466 = smul.addr %s17, 2
          %s467 = smul.addr %s466, 128
          %s468 = scalar_lea.hbm %s3, %s467
          %s469 = sshll.u32 %s459, 4
          %s470 = int_to_ptr.vmem [resolvable:$true] %s469
          %475 = dma.vmem_to_hbm [thread:$0]  %s470, 256, %s468, %s456, 128, 128, 8
        $region36: #{tpu_custom_call.1} parent=31 // pred_fallthru
          _
      $region32: #{tpu_custom_call.1} parent=5 // pred_fallthru
        _
      %p476 = scmp.le.s32.totalorder 2, %s12
      // Predicated region
      $region37: #{tpu_custom_call.1} parent=5 // pred_check
        %p477 = pneg %p476
      $region38: #{tpu_custom_call.1} parent=5 // pred_check_branch
        %479 = sbr.rel (%p477) target = $region40
      $region39: #{tpu_custom_call.1} parent=5 // pred_region
        %s480 = ssub.s32 %s12, 2
        // Predicated region
        $region41: #{tpu_custom_call.1} parent=39 // pred_check
          %p481 = pneg %p109
        $region42: #{tpu_custom_call.1} parent=39 // pred_check_branch
          %483 = sbr.rel (%p481) target = $region44
        $region43: #{tpu_custom_call.1} parent=39 // pred_region
          %s484 = sand.u32 %s94, 1
          %s485 = scalar_lea.sflag [#allocation3], %s484
          %s486 = sand.u32 %s94, 1
          %s487 = smul.addr %s486, 16
          %s488 = scalar_lea.vmem [#allocation2], %s487
          %489 = dma.done %s485, 256
        $region44: #{tpu_custom_call.1} parent=39 // pred_fallthru
          _
      $region40: #{tpu_custom_call.1} parent=5 // pred_fallthru
        _
    $region6: #{tpu_custom_call.1} parent=1 // loop_footer
      %s16 = sadd.s32 1, %s12
    $region7: #{tpu_custom_call.1} parent=1 // loop_footer_branch
      %11 = sbr.rel target = $region3
    $region8: #{tpu_custom_call.1} parent=1 // loop_exit
      _
    %490 = vsyncpa [#allocation3], 1
    %s491 = scalar_lea.sflag [#allocation3], 1
    %492 = vsyncpa %s491, 1

</llo_original>
